<compile_context>
chip_gen: v5e
topology: v5e:2x2
jax: 0.10.0
libtpu: 0.0.40
codegen_flags: <defaults>
</compile_context>

<pallas_src>
import functools
import math

import jax
import jax.numpy as jnp
from jax.experimental import pallas as pl
from jax.experimental.pallas import tpu as pltpu


# --------------------------------------------------------------------------- #
# Stage 1: adaptive support(s) + node-adaptive weights / bias (run once).
# --------------------------------------------------------------------------- #
def _supports_kernel(e_ref, wp_ref, bp_ref, s_ref, s2_ref, wn_ref, b_ref, *,
                     approx_recip):
    E = e_ref[...]                                            # (N, D) f32
    # E @ E^T without materialising E^T: contract d with d.
    logits = jax.lax.dot_general(E, E, (((1,), (1,)), ((), ())),
                                 preferred_element_type=jnp.float32)   # (N, N)
    logits = jnp.maximum(logits, 0.0)
    m = jnp.max(logits, axis=1, keepdims=True)
    ex = jnp.exp(logits - m)                                  # EUP
    denom = jnp.sum(ex, axis=1, keepdims=True)
    # approx=True -> EUP vrcp (production); approx=False for exact f32 checks.
    S = ex * pl.reciprocal(denom, approx=approx_recip)        # (N, N) f32
    s_ref[...] = S.astype(s_ref.dtype)
    # Fold the Chebyshev 2.0 into the support once: removes a per-step
    # (N, Bt*Cin) VPU multiply from the diffusion loop.
    s2_ref[...] = (2.0 * S).astype(s2_ref.dtype)
    # Node-adaptive weights, flat & lane-dense (N, K*Cin*Cout); reshaped to
    # (N, K*Cin, Cout) by a free XLA reshape in the wrapper.
    wn_ref[...] = jnp.dot(E, wp_ref[...], preferred_element_type=jnp.float32)
    b_ref[...] = jnp.dot(E, bp_ref[...], preferred_element_type=jnp.float32)


# --------------------------------------------------------------------------- #
# Stage 2: batch-column-parallel Chebyshev diffusion + per-node contraction.
# --------------------------------------------------------------------------- #
def _diffusion_kernel(s_ref, s2_ref, wn_ref, bias_ref, x_ref, out_ref, *,
                      K, Bt, Cin, Cout, mxu_dtype):
    N = s_ref.shape[0]
    S = s_ref[...]                                   # (N, N)  mxu_dtype
    S2 = s2_ref[...]                                 # (N, N)  mxu_dtype (= 2S)
    X = x_ref[...].astype(jnp.float32)               # (N, Bt*Cin)
    X_mxu = X.astype(mxu_dtype)

    # Feature-pushed Chebyshev recurrence: xg_0 = X, xg_1 = S X,
    # xg_k = (2S) xg_{k-1} - xg_{k-2}. Each step is one lane-dense
    # (N, N) @ (N, Bt*Cin) MXU matmul; f32 accumulation throughout.
    xgs = [X]
    xg1 = jnp.dot(S, X_mxu, preferred_element_type=jnp.float32)
    xgs.append(xg1)
    prev2, prev1 = X, xg1
    for _ in range(2, K):
        xg = jnp.dot(S2, prev1.astype(mxu_dtype),
                     preferred_element_type=jnp.float32) - prev2
        xgs.append(xg)
        prev2, prev1 = prev1, xg

    # Stack diffusion orders along the contraction axis: (N, Bt, K*Cin),
    # k outer / i inner, matching Wn's (k, i) flattening.
    xg_all = jnp.concatenate([g.reshape(N, Bt, Cin) for g in xgs], axis=-1)

    # Per-node contraction on the MXU, batched over n, one shot over K*Cin:
    #   acc[n, b, o] = sum_{ki} xg_all[n, b, ki] * Wn[n, ki, o]
    acc = jnp.einsum('nbi,nio->nbo', xg_all, wn_ref[...],
                     preferred_element_type=jnp.float32)      # (N, Bt, Cout)
    out = acc + bias_ref[...][:, None, :]
    # lane-dense 2-D store; (B, N, Cout) recovered by the wrapper/consumer.
    out_ref[...] = out.reshape(N, Bt * Cout).astype(out_ref.dtype)


# --------------------------------------------------------------------------- #
# Sizing helpers.
# --------------------------------------------------------------------------- #
def _vmem_capacity_bytes():
    try:
        return int(pltpu.get_tpu_info().vmem_capacity_bytes)
    except Exception:
        return 64 * 1024 * 1024          # conservative fallback (v7x per-TC)


def _lcm(a, b):
    return a * b // math.gcd(a, b)


def _footprints(N, K, Cin, Cout, mxu_itemsize, io_itemsize):
    # Resident, loaded once (constant index_map => not re-DMAed per block).
    fixed = (2 * N * N * mxu_itemsize            # S, 2S
             + N * K * Cin * Cout * 4            # Wn
             + N * Cout * 4)                     # bias
    # Per batch-row bytes: xg_0..xg_{K-1} + stacked xg_all (f32), acc, plus
    # double-buffered feat / out blocks.
    per_b = N * (2 * K * Cin * 4 + Cin * 4 + Cout * 4
                 + 2 * Cin * io_itemsize + 2 * Cout * io_itemsize)
    return fixed, per_b


def _choose_batch_block(B, N, K, Cin, Cout, mxu_itemsize, io_itemsize):
    """Pick the batch block Bt and the (possibly zero-padded) batch size."""
    cap = _vmem_capacity_bytes()
    budget = int(cap * 0.6)                      # headroom for compiler scratch
    fixed, per_b = _footprints(N, K, Cin, Cout, mxu_itemsize, io_itemsize)
    bt_fit = max(1, (budget - fixed) // per_b) if budget > fixed else 1
    # Lane alignment so split feat/out blocks have last dims % 128 == 0.
    align = _lcm(128 // math.gcd(Cin, 128), 128 // math.gcd(Cout, 128))
    # On ~64 MiB parts (v7x: 2 TensorCores/chip) prefer >= 2 parallel blocks
    # when the batch is large enough to split on aligned boundaries; on the
    # 128 MiB parts (v5e/v6e) keep the block as big as VMEM allows.
    want_split = cap <= 64 * 1024 * 1024 and B >= 2 * align
    if bt_fit >= B and not want_split:
        return B, B                              # single full-batch block
    bt = min(bt_fit, (B + 1) // 2) if want_split else bt_fit
    bt = max(align, (bt // align) * align)
    if bt >= B:
        return B, B
    b_pad = -(-B // bt) * bt
    return bt, b_pad


def _vmem_limit(working_bytes):
    cap = _vmem_capacity_bytes()
    return int(min(int(cap * 0.9), max(2 * working_bytes, 32 * 1024 * 1024)))


# --------------------------------------------------------------------------- #
# Wrapper.
# --------------------------------------------------------------------------- #
def avwgcn_forward(node_embeddings, feat, weights_pool, bias_pool, *,
                   mxu_dtype=jnp.bfloat16, approx_recip=True):
    N, D = node_embeddings.shape
    B, N2, Cin = feat.shape
    D2, K, Cin2, Cout = weights_pool.shape
    assert N == N2 and D == D2 and Cin == Cin2 and K >= 2

    mxu_itemsize = jnp.dtype(mxu_dtype).itemsize
    io_itemsize = jnp.dtype(feat.dtype).itemsize

    # ---- Stage 1: supports + node-adaptive weights/bias (one tiny call) -----
    wp_flat = weights_pool.reshape(D, K * Cin * Cout)        # lane-dense matmul
    est1 = (N * D * 4 + D * K * Cin * Cout * 4 + D * Cout * 4
            + 3 * N * N * 4 + 2 * N * N * mxu_itemsize
            + N * K * Cin * Cout * 4 + N * Cout * 4)
    s, s2, wn_flat, bias = pl.pallas_call(
        functools.partial(_supports_kernel, approx_recip=approx_recip),
        out_shape=(
            jax.ShapeDtypeStruct((N, N), mxu_dtype),             # S
            jax.ShapeDtypeStruct((N, N), mxu_dtype),             # 2S
            jax.ShapeDtypeStruct((N, K * Cin * Cout), jnp.float32),
            jax.ShapeDtypeStruct((N, Cout), jnp.float32),
        ),
        compiler_params=pltpu.CompilerParams(vmem_limit_bytes=_vmem_limit(est1)),
    )(node_embeddings, wp_flat, bias_pool)
    wn = wn_flat.reshape(N, K * Cin, Cout)       # free XLA trailing-dim split

    # ---- Stage 2: batch-column-parallel diffusion + contraction -------------
    Bt, B_pad = _choose_batch_block(B, N, K, Cin, Cout, mxu_itemsize,
                                    io_itemsize)
    # TODO(synk): in a full AGCRN stack, feed feat already laid out as
    # (N, B*Cin) and let the consumer take the (N, B*Cout) slab to drop these
    # two HBM-bound transposes around the kernel.
    feat_t = jnp.transpose(feat, (1, 0, 2)).reshape(N, B * Cin)
    if B_pad != B:
        feat_t = jnp.pad(feat_t, ((0, 0), (0, (B_pad - B) * Cin)))

    fixed, per_b = _footprints(N, K, Cin, Cout, mxu_itemsize, io_itemsize)
    est2 = fixed + Bt * per_b

    out_t = pl.pallas_call(
        functools.partial(_diffusion_kernel, K=K, Bt=Bt, Cin=Cin, Cout=Cout,
                          mxu_dtype=mxu_dtype),
        out_shape=jax.ShapeDtypeStruct((N, B_pad * Cout), feat.dtype),
        grid=(B_pad // Bt,),
        in_specs=[
            pl.BlockSpec((N, N), lambda b: (0, 0)),                  # S (resident)
            pl.BlockSpec((N, N), lambda b: (0, 0)),                  # 2S (resident)
            pl.BlockSpec((N, K * Cin, Cout), lambda b: (0, 0, 0)),   # Wn (resident)
            pl.BlockSpec((N, Cout), lambda b: (0, 0)),               # bias (resident)
            pl.BlockSpec((N, Bt * Cin), lambda b: (0, b)),           # feat block
        ],
        out_specs=pl.BlockSpec((N, Bt * Cout), lambda b: (0, b)),
        compiler_params=pltpu.CompilerParams(
            dimension_semantics=("parallel",),
            vmem_limit_bytes=_vmem_limit(est2),
        ),
    )(s, s2, wn, bias, feat_t)

    out = out_t[:, :B * Cout].reshape(N, B, Cout)
    return jnp.transpose(out, (1, 0, 2))                     # (B, N, Cout)


# --------------------------------------------------------------------------- #
# Pure-JAX reference (mirrors the PyTorch module).
# --------------------------------------------------------------------------- #
def avwgcn_reference(E, feat, wp, bp):
    N = E.shape[0]
    K = wp.shape[1]
    sup = jax.nn.softmax(jax.nn.relu(E @ E.T), axis=1)
    ss = [jnp.eye(N, dtype=jnp.float32), sup]
    for _ in range(2, K):
        ss.append(2.0 * sup @ ss[-1] - ss[-2])
    sup_s = jnp.stack(ss, axis=0)
    weights = jnp.einsum('nd,dkio->nkio', E, wp)
    bias = E @ bp
    x_g = jnp.einsum('knm,bmc->bknc', sup_s, feat)
    x_g = jnp.transpose(x_g, (0, 2, 1, 3))
    return jnp.einsum('bnki,nkio->bno', x_g, weights) + bias


if __name__ == "__main__":
    # Small shapes consistent with the module.
    B, N, D = 2, 16, 8        # batch, num nodes, embed_dim
    K, Cin, Cout = 3, 4, 8    # diffusion_steps (cheb_k), in_feats, out_feats

    key = jax.random.PRNGKey(0)
    k_e, k_f, k_w, k_b = jax.random.split(key, 4)

    node_embeddings = jax.random.normal(k_e, (N, D), dtype=jnp.float32)
    feat = jax.random.normal(k_f, (B, N, Cin), dtype=jnp.float32)

    # kaiming_uniform_(a=sqrt(5)) on (D, K, Cin, Cout): bound = 1/sqrt(K*Cin*Cout)
    bound = 1.0 / math.sqrt(K * Cin * Cout)
    weights_pool = jax.random.uniform(
        k_w, (D, K, Cin, Cout), dtype=jnp.float32, minval=-bound, maxval=bound)
    # The module initialises bias_pool to zeros; use a small nonzero one so the
    # bias path is exercised.
    bias_pool = 0.1 * jax.random.normal(k_b, (D, Cout), dtype=jnp.float32)

    ref = avwgcn_reference(node_embeddings, feat, weights_pool, bias_pool)

    # Exact path (f32 MXU operands, exact reciprocal): tight f32 check.
    out_exact = avwgcn_forward(node_embeddings, feat, weights_pool, bias_pool,
                               mxu_dtype=jnp.float32, approx_recip=False)
    out_exact = jax.block_until_ready(out_exact)
    assert out_exact.shape == (B, N, Cout)
    assert jnp.allclose(out_exact, ref, rtol=1e-4, atol=1e-4)

    # Production path (bf16 MXU operands, f32 accumulation, EUP reciprocal).
    out_prod = avwgcn_forward(node_embeddings, feat, weights_pool, bias_pool)
    out_prod = jax.block_until_ready(out_prod)
    assert out_prod.shape == (B, N, Cout)
    assert jnp.allclose(out_prod, ref, rtol=5e-2, atol=5e-2)

    print("KERNEL_OK")
</pallas_src>

<mosaic_0001>
module attributes {stable_mosaic.version = 11 : i64} {
  func.func @_supports_kernel(%arg0: memref<16x8xf32, #tpu.memory_space<vmem>>, %arg1: memref<8x96xf32, #tpu.memory_space<vmem>>, %arg2: memref<8x8xf32, #tpu.memory_space<vmem>>, %arg3: memref<16x16xf32, #tpu.memory_space<vmem>>, %arg4: memref<16x16xf32, #tpu.memory_space<vmem>>, %arg5: memref<16x96xf32, #tpu.memory_space<vmem>>, %arg6: memref<16x8xf32, #tpu.memory_space<vmem>>) attributes {dimension_semantics = [], scalar_prefetch = 0 : i64, scratch_operands = 0 : i64, tpu.core_type = #tpu.core_type<tc>} {
    %c0 = arith.constant 0 : index
    %c0_0 = arith.constant 0 : index
    %0 = vector.load %arg0[%c0, %c0_0] : memref<16x8xf32, #tpu.memory_space<vmem>>, vector<16x8xf32>
    %cst = arith.constant dense<0.000000e+00> : vector<16x16xf32>
    %1 = tpu.matmul %0, %0, %cst {dimension_numbers = #tpu.dot_dimension_numbers<[1], [1], [0], [0], [0, 0, 1, 0], [], []>} : vector<16x8xf32>, vector<16x8xf32>, vector<16x16xf32> -> vector<16x16xf32>
    %cst_1 = arith.constant 0.000000e+00 : f32
    %2 = vector.broadcast %cst_1 : f32 to vector<16x16xf32>
    %3 = arith.maximumf %1, %2 : vector<16x16xf32>
    %cst_2 = arith.constant dense<0xFF800000> : vector<16xf32>
    %4 = vector.multi_reduction <maximumf>, %3, %cst_2 [1] : vector<16x16xf32> to vector<16xf32>
    %5 = vector.shape_cast %4 : vector<16xf32> to vector<16x1xf32>
    %6 = vector.broadcast %5 : vector<16x1xf32> to vector<16x16xf32>
    %7 = arith.subf %3, %6 : vector<16x16xf32>
    %8 = math.exp %7 : vector<16x16xf32>
    %cst_3 = arith.constant dense<0.000000e+00> : vector<16xf32>
    %9 = vector.multi_reduction <add>, %8, %cst_3 [1] : vector<16x16xf32> to vector<16xf32>
    %10 = vector.shape_cast %9 : vector<16xf32> to vector<16x1xf32>
    %11 = tpu.reciprocal %10 : vector<16x1xf32> -> vector<16x1xf32>
    %12 = vector.broadcast %11 : vector<16x1xf32> to vector<16x16xf32>
    %13 = arith.mulf %8, %12 : vector<16x16xf32>
    %c0_4 = arith.constant 0 : index
    %c0_5 = arith.constant 0 : index
    %14 = vector.load %arg3[%c0_4, %c0_5] : memref<16x16xf32, #tpu.memory_space<vmem>>, vector<16x16xf32>
    tpu.vector_store %arg3[%c0_4, %c0_5], %13 {strides = array<i32>} : memref<16x16xf32, #tpu.memory_space<vmem>>, vector<16x16xf32>,
    %cst_6 = arith.constant 2.000000e+00 : f32
    %15 = vector.broadcast %cst_6 : f32 to vector<16x16xf32>
    %16 = arith.mulf %15, %13 : vector<16x16xf32>
    %c0_7 = arith.constant 0 : index
    %c0_8 = arith.constant 0 : index
    %17 = vector.load %arg4[%c0_7, %c0_8] : memref<16x16xf32, #tpu.memory_space<vmem>>, vector<16x16xf32>
    tpu.vector_store %arg4[%c0_7, %c0_8], %16 {strides = array<i32>} : memref<16x16xf32, #tpu.memory_space<vmem>>, vector<16x16xf32>,
    %c0_9 = arith.constant 0 : index
    %c0_10 = arith.constant 0 : index
    %18 = vector.load %arg1[%c0_9, %c0_10] : memref<8x96xf32, #tpu.memory_space<vmem>>, vector<8x96xf32>
    %cst_11 = arith.constant dense<0.000000e+00> : vector<16x96xf32>
    %19 = tpu.matmul %0, %18, %cst_11 {dimension_numbers = #tpu.dot_dimension_numbers<[1], [0], [0], [1], [0, 0, 1, 1], [], []>} : vector<16x8xf32>, vector<8x96xf32>, vector<16x96xf32> -> vector<16x96xf32>
    %c0_12 = arith.constant 0 : index
    %c0_13 = arith.constant 0 : index
    %20 = vector.load %arg5[%c0_12, %c0_13] : memref<16x96xf32, #tpu.memory_space<vmem>>, vector<16x96xf32>
    tpu.vector_store %arg5[%c0_12, %c0_13], %19 {strides = array<i32>} : memref<16x96xf32, #tpu.memory_space<vmem>>, vector<16x96xf32>,
    %c0_14 = arith.constant 0 : index
    %c0_15 = arith.constant 0 : index
    %21 = vector.load %arg2[%c0_14, %c0_15] : memref<8x8xf32, #tpu.memory_space<vmem>>, vector<8x8xf32>
    %cst_16 = arith.constant dense<0.000000e+00> : vector<16x8xf32>
    %22 = tpu.matmul %0, %21, %cst_16 {dimension_numbers = #tpu.dot_dimension_numbers<[1], [0], [0], [1], [0, 0, 1, 1], [], []>} : vector<16x8xf32>, vector<8x8xf32>, vector<16x8xf32> -> vector<16x8xf32>
    %c0_17 = arith.constant 0 : index
    %c0_18 = arith.constant 0 : index
    %23 = vector.load %arg6[%c0_17, %c0_18] : memref<16x8xf32, #tpu.memory_space<vmem>>, vector<16x8xf32>
    tpu.vector_store %arg6[%c0_17, %c0_18], %22 {strides = array<i32>} : memref<16x8xf32, #tpu.memory_space<vmem>>, vector<16x8xf32>,
    return
  }
}

</mosaic_0001>

<llo_original>
// kernel: tpu_custom_call.1
$region0: #{tpu_custom_call.1}
  #allocation0 [shape = 'u32[]', space=smem, size = 0x4, offset = 0x4, fixed_abs, tag = 'smem constant byte address 0x4 - core index']
  #allocation1 [shape = 'u32[72,128]{1,0:T(1,128)}', space=vmem, size = 0x9000, scoped, tag = 'internal scratch']
  %s0 = inlined_call_operand.vmem [shape: f32[16,8], index: 0, kind: input, shape index: {}]
  %s1 = inlined_call_operand.vmem [shape: f32[8,96], index: 1, kind: input, shape index: {}]
  %s2 = inlined_call_operand.vmem [shape: f32[8,8], index: 2, kind: input, shape index: {}]
  %s3 = inlined_call_operand.hbm [shape: f32[16,16], index: 3, kind: output, shape index: {0}]
  %s4 = inlined_call_operand.hbm [shape: f32[16,16], index: 4, kind: output, shape index: {1}]
  %s5 = inlined_call_operand.hbm [shape: f32[16,96], index: 5, kind: output, shape index: {2}]
  %s6 = inlined_call_operand.vmem [shape: f32[16,8], index: 6, kind: output, shape index: {3}]
  %7 = xla_tuple %s3, %s4, %s5, %s6
  %s8 = sld [smem:[#allocation0]]
  $region46: #{tpu_custom_call.1} parent=0
    _
  %s10 = ssub.s32 1, %s8
  %s11 = scalar_select 0, %s10, %s8
  $region1: #{tpu_custom_call.1} parent=0
    #allocation2 [shape = 'u8[8192]{0}', space=vmem, size = 0x2000, scoped, tag = 'output window, operand 0, single buffered']
    #allocation3 [shape = 's32[1]{0}', space=sflag, size = 0x4, scoped, tag = 'scoped memory for tpu_custom_call.1']
    #allocation4 [shape = 'u8[8192]{0}', space=vmem, size = 0x2000, scoped, tag = 'output window, operand 1, single buffered']
    #allocation5 [shape = 's32[1]{0}', space=sflag, size = 0x4, scoped, tag = 'scoped memory for tpu_custom_call.1']
    #allocation6 [shape = 'u8[8192]{0}', space=vmem, size = 0x2000, scoped, tag = 'output window, operand 2, single buffered']
    %12 = vsyncpa [#allocation3], 0
    %13 = vsyncpa [#allocation5], 0
    // Predicated region
    $region2: #{tpu_custom_call.1} parent=1 // pred_check
      _
    $region3: #{tpu_custom_call.1} parent=1 // pred_check_branch
      %15 = sbr.rel (0) target = $region5
    $region4: #{tpu_custom_call.1} parent=1 // pred_region
      _
    $region5: #{tpu_custom_call.1} parent=1 // pred_fallthru
      _
    // Predicated region
    $region6: #{tpu_custom_call.1} parent=1 // pred_check
      _
    $region7: #{tpu_custom_call.1} parent=1 // pred_check_branch
      %17 = sbr.rel (0) target = $region9
    $region8: #{tpu_custom_call.1} parent=1 // pred_region
      _
    $region9: #{tpu_custom_call.1} parent=1 // pred_fallthru
      _
    // Predicated region
    $region10: #{tpu_custom_call.1} parent=1 // pred_check
      _
    $region11: #{tpu_custom_call.1} parent=1 // pred_check_branch
      %19 = sbr.rel (0) target = $region13
    $region12: #{tpu_custom_call.1} parent=1 // pred_region
      _
    $region13: #{tpu_custom_call.1} parent=1 // pred_fallthru
      _
    %v20 = vld [vmem:[%s0] sm:$0xff]
    %v21 = vld [vmem:[%s0 + $0x8] sm:$0xff]
    %vm22 = vcmask 64512
    %v24 = vsel %vm22, %v20, 0
    %v27 = vsel %vm22, %v21, 0
    %29 = vmatpush.xpose.msra.mxu0 0.0
    %30 = vmatpush.xpose.msra.mxu0 0.0
    %31 = vmatpush.xpose.msra.mxu0 0.0
    %32 = vmatpush.xpose.msra.mxu0 0.0
    %33 = vmatpush.xpose.msra.mxu0 0.0
    %34 = vmatpush.xpose.msra.mxu0 0.0
    %35 = vmatpush.xpose.msra.mxu0 0.0
    %36 = vmatpush.xpose.msra.mxu0 0.0
    %37 = vmatpush.xpose.msra.mxu0 0.0
    %38 = vmatpush.xpose.msra.mxu0 0.0
    %39 = vmatpush.xpose.msra.mxu0 0.0
    %40 = vmatpush.xpose.msra.mxu0 0.0
    %41 = vmatpush.xpose.msra.mxu0 0.0
    %42 = vmatpush.xpose.msra.mxu0 0.0
    %43 = vmatpush.xpose.msra.mxu0 %v27
    %44 = vmatpush.xpose.msra.mxu0 %v24
    %45 = vmatmul.f32.gmra.mxu0 %v24
    %v46 = vpop.f32.mrf.mxu0
    %v47 = vadd.f32 0.0, %v46
    %48 = vmatmul.f32.gmra.mxu0 %v27
    %v49 = vpop.f32.mrf.mxu0
    %v50 = vadd.f32 0.0, %v49
    %51 = vdwg.mxu0
    %v52 = vmax.f32 %v47, 0.0
    %v53 = vmax.f32 %v50, 0.0
    %vm54 = vcmask 130048
    %v55 = vsel %vm54, %v52, -inf
    %56 = vmax.xlane.f32.xlu0 %v55
    %v57 = vpop.xlane.xlu0 %56
    %v58 = vsel %vm54, %v53, -inf
    %59 = vmax.xlane.f32.xlu0 %v58
    %v60 = vpop.xlane.xlu0 %59
    %v61 = vsub.f32 %v52, %v57
    %v62 = vsub.f32 %v53, %v60
    %v63 = vmul.f32 %v61, 1.442695
    %v64 = vpow.pop %v63
    %v65 = vmul.f32 %v62, 1.442695
    %v66 = vpow.pop %v65
    %v67 = vsel %vm54, %v64, 0.0
    %68 = vadd.xlane.f32.xlu0 %v67
    %v69 = vpop.xlane.xlu0 %68
    %v70 = vsel %vm54, %v66, 0.0
    %71 = vadd.xlane.f32.xlu0 %v70
    %v72 = vpop.xlane.xlu0 %71
    %v73 = vrcp.pop %v69
    %v74 = vmul.f32 %v69, %v73
    %v75 = vsub.f32 1.0, %v74
    %v76 = vmul.f32 %v73, %v75
    %v77 = vadd.f32 %v73, %v76
    %vm78 = vweird.f32 %v69
    %vm79 = vweird.f32 %v73
    %vm80 = vmor %vm78, %vm79
    %v81 = vsel %vm80, %v73, %v77
    %v82 = vand.u32 2147483647, %v69
    %vm83 = vcmp.eq.f32.partialorder %v82, 8.507059e+37
    %v84 = vand.u32 %v69, 2147483648
    %v85 = vor.u32 1.1754944e-38, %v84
    %v86 = vsel %vm83, %v85, %v81
    %v87 = vrcp.pop %v72
    %v88 = vmul.f32 %v72, %v87
    %v89 = vsub.f32 1.0, %v88
    %v90 = vmul.f32 %v87, %v89
    %v91 = vadd.f32 %v87, %v90
    %vm92 = vweird.f32 %v72
    %vm93 = vweird.f32 %v87
    %vm94 = vmor %vm92, %vm93
    %v95 = vsel %vm94, %v87, %v91
    %v96 = vand.u32 2147483647, %v72
    %vm97 = vcmp.eq.f32.partialorder %v96, 8.507059e+37
    %v98 = vand.u32 %v72, 2147483648
    %v99 = vor.u32 1.1754944e-38, %v98
    %v100 = vsel %vm97, %v99, %v95
    %v101 = vmul.f32 %v64, %v86
    %v102 = vmul.f32 %v66, %v100
    %103 = vst.msk [vmem:[#allocation2] sm:$0xff] %vm54, %v101
    %104 = vst.msk [vmem:[#allocation2 + $0x8] sm:$0xff] %vm54, %v102
    %v105 = vmul.f32 %v101, 2.0
    %v106 = vmul.f32 %v102, 2.0
    %107 = vst.msk [vmem:[#allocation4] sm:$0xff] %vm54, %v105
    %108 = vst.msk [vmem:[#allocation4 + $0x8] sm:$0xff] %vm54, %v106
    %v109 = vld [vmem:[%s1] sm:$0xff]
    %110 = vmatpush.msra.mxu0 0.0
    %111 = vmatpush.msra.mxu0 0.0
    %112 = vmatpush.msra.mxu0 0.0
    %113 = vmatpush.msra.mxu0 0.0
    %114 = vmatpush.msra.mxu0 0.0
    %115 = vmatpush.msra.mxu0 0.0
    %116 = vmatpush.msra.mxu0 0.0
    %117 = vmatpush.msra.mxu0 0.0
    %118 = vmatpush.msra.mxu0 0.0
    %119 = vmatpush.msra.mxu0 0.0
    %120 = vmatpush.msra.mxu0 0.0
    %121 = vmatpush.msra.mxu0 0.0
    %122 = vmatpush.msra.mxu0 0.0
    %123 = vmatpush.msra.mxu0 0.0
    %124 = vmatpush.msra.mxu0 0.0
    %125 = vmatpush.msra.mxu0 %v109
    %126 = vmatmul.f32.gmra.mxu0 %v24
    %v127 = vpop.f32.mrf.mxu0
    %v128 = vadd.f32 0.0, %v127
    %129 = vmatmul.f32.gmra.mxu0 %v27
    %v130 = vpop.f32.mrf.mxu0
    %v131 = vadd.f32 0.0, %v130
    %132 = vdwg.mxu0
    %vm133 = vcmask 785408
    %134 = vst.msk [vmem:[#allocation6] sm:$0xff] %vm133, %v128
    %135 = vst.msk [vmem:[#allocation6 + $0x8] sm:$0xff] %vm133, %v131
    %v136 = vld [vmem:[%s2] sm:$0xff]
    %137 = vmatpush.msra.mxu0 0.0
    %138 = vmatpush.msra.mxu0 0.0
    %139 = vmatpush.msra.mxu0 0.0
    %140 = vmatpush.msra.mxu0 0.0
    %141 = vmatpush.msra.mxu0 0.0
    %142 = vmatpush.msra.mxu0 0.0
    %143 = vmatpush.msra.mxu0 0.0
    %144 = vmatpush.msra.mxu0 0.0
    %145 = vmatpush.msra.mxu0 0.0
    %146 = vmatpush.msra.mxu0 0.0
    %147 = vmatpush.msra.mxu0 0.0
    %148 = vmatpush.msra.mxu0 0.0
    %149 = vmatpush.msra.mxu0 0.0
    %150 = vmatpush.msra.mxu0 0.0
    %151 = vmatpush.msra.mxu0 0.0
    %152 = vmatpush.msra.mxu0 %v136
    %153 = vmatmul.f32.gmra.mxu0 %v24
    %v154 = vpop.f32.mrf.mxu0
    %v155 = vadd.f32 0.0, %v154
    %156 = vmatmul.f32.gmra.mxu0 %v27
    %v157 = vpop.f32.mrf.mxu0
    %v158 = vadd.f32 0.0, %v157
    %159 = vdwg.mxu0
    %160 = vst.msk [vmem:[%s6] sm:$0xff] %vm22, %v155
    %161 = vst.msk [vmem:[%s6 + $0x8] sm:$0xff] %vm22, %v158
    // Predicated region
    $region14: #{tpu_custom_call.1} parent=1 // pred_check
      _
    $region15: #{tpu_custom_call.1} parent=1 // pred_check_branch
      %163 = sbr.rel (0) target = $region17
    $region16: #{tpu_custom_call.1} parent=1 // pred_region
      %165 = vsyncadd [#allocation3], 0
      %s166 = sshll.u32 [#allocation2], 4
      %s167 = int_to_ptr.vmem [resolvable:$true] %s166
      %s168 = sshll.u32 %s3, 4
      %s169 = int_to_ptr.hbm [resolvable:$true] %s168
      %174 = dma.vmem_to_hbm [thread:$0]  %s167, 256, %s169, [#allocation3], 128, 128, 8
    $region17: #{tpu_custom_call.1} parent=1 // pred_fallthru
      _
    // Predicated region
    $region18: #{tpu_custom_call.1} parent=1 // pred_check
      _
    $region19: #{tpu_custom_call.1} parent=1 // pred_check_branch
      %176 = sbr.rel (0) target = $region21
    $region20: #{tpu_custom_call.1} parent=1 // pred_region
      %178 = vsyncadd [#allocation5], 0
      %s179 = sshll.u32 [#allocation4], 4
      %s180 = int_to_ptr.vmem [resolvable:$true] %s179
      %s181 = sshll.u32 %s4, 4
      %s182 = int_to_ptr.hbm [resolvable:$true] %s181
      %187 = dma.vmem_to_hbm [thread:$0]  %s180, 256, %s182, [#allocation5], 128, 128, 8
    $region21: #{tpu_custom_call.1} parent=1 // pred_fallthru
      _
    // Predicated region
    $region22: #{tpu_custom_call.1} parent=1 // pred_check
      _
    $region23: #{tpu_custom_call.1} parent=1 // pred_check_branch
      %189 = sbr.rel (0) target = $region25
    $region24: #{tpu_custom_call.1} parent=1 // pred_region
      %191 = vsyncadd [#allocation5], 0
      %s192 = sshll.u32 [#allocation6], 4
      %s193 = int_to_ptr.vmem [resolvable:$true] %s192
      %s194 = sshll.u32 %s5, 4
      %s195 = int_to_ptr.hbm [resolvable:$true] %s194
      %200 = dma.vmem_to_hbm [thread:$0]  %s193, 256, %s195, [#allocation5], 128, 128, 8
    $region25: #{tpu_custom_call.1} parent=1 // pred_fallthru
      _
    // Predicated region
    $region26: #{tpu_custom_call.1} parent=1 // pred_check
      _
    $region27: #{tpu_custom_call.1} parent=1 // pred_check_branch
      %202 = sbr.rel (0) target = $region29
    $region28: #{tpu_custom_call.1} parent=1 // pred_region
      _
    $region29: #{tpu_custom_call.1} parent=1 // pred_fallthru
      _
    // Predicated region
    $region30: #{tpu_custom_call.1} parent=1 // pred_check
      _
    $region31: #{tpu_custom_call.1} parent=1 // pred_check_branch
      %204 = sbr.rel (0) target = $region33
    $region32: #{tpu_custom_call.1} parent=1 // pred_region
      %206 = dma.done [#allocation3], 256
    $region33: #{tpu_custom_call.1} parent=1 // pred_fallthru
      _
    // Predicated region
    $region34: #{tpu_custom_call.1} parent=1 // pred_check
      _
    $region35: #{tpu_custom_call.1} parent=1 // pred_check_branch
      %208 = sbr.rel (0) target = $region37
    $region36: #{tpu_custom_call.1} parent=1 // pred_region
      %210 = dma.done [#allocation5], 256
    $region37: #{tpu_custom_call.1} parent=1 // pred_fallthru
      _
    // Predicated region
    $region38: #{tpu_custom_call.1} parent=1 // pred_check
      _
    $region39: #{tpu_custom_call.1} parent=1 // pred_check_branch
      %212 = sbr.rel (0) target = $region41
    $region40: #{tpu_custom_call.1} parent=1 // pred_region
      %214 = dma.done [#allocation5], 256
    $region41: #{tpu_custom_call.1} parent=1 // pred_fallthru
      _
    // Predicated region
    $region42: #{tpu_custom_call.1} parent=1 // pred_check
      _
    $region43: #{tpu_custom_call.1} parent=1 // pred_check_branch
      %216 = sbr.rel (0) target = $region45
    $region44: #{tpu_custom_call.1} parent=1 // pred_region
      _
    $region45: #{tpu_custom_call.1} parent=1 // pred_fallthru
      _
    %217 = vsyncpa [#allocation3], 1
    %218 = vsyncpa [#allocation5], 1

</llo_original>
